<compile_context>
chip_gen: v7x
topology: tpu7x:2x2x1
jax: 0.10.0
libtpu: 0.0.40
codegen_flags: <defaults>
</compile_context>

<pallas_src>
import jax
import jax.numpy as jnp
from jax.experimental import pallas as pl
from jax.experimental.pallas import tpu as pltpu


def _round_up(x, m):
    return ((x + m - 1) // m) * m


def _tiled_affine_kernel(x_ref, w_ref, b_ref, o_ref, acc_ref):
    """One (tm, tn) output tile accumulated over the K grid axis."""
    k = pl.program_id(2)

    @pl.when(k == 0)
    def _init():
        acc_ref[...] = jnp.zeros_like(acc_ref)

    # MXU matmul with float32 accumulation (inputs may be bf16).
    acc_ref[...] += jnp.dot(
        x_ref[...], w_ref[...], preferred_element_type=jnp.float32
    )

    @pl.when(k == pl.num_programs(2) - 1)
    def _epilogue():
        # Bias added exactly once, in the final reduction step.
        o_ref[...] = (acc_ref[...] + b_ref[...]).astype(o_ref.dtype)


def external_layer_forward(
    x,
    w,
    b,
    *,
    tm=256,
    tn=256,
    tk=512,
    compute_dtype=jnp.bfloat16,
    vmem_limit_bytes=32 << 20,
):
    """y = x @ w + b via a tiled Pallas matmul.

    x: (N, F_in)    float32   (NDN convention: NT x prod(input_dims))
    w: (F_in, F_out) float32
    b: (1, F_out)    float32
    returns (N, F_out) float32
    """
    n, f_in = x.shape
    f_in_w, f_out = w.shape
    assert f_in == f_in_w, (f_in, f_in_w)
    out_dtype = x.dtype

    # Effective tile sizes: never larger than the (alignment-rounded) array
    # extents, always (8, 128)-aligned so every block is lane/sublane dense.
    tm_e = min(tm, _round_up(n, 8))
    tk_e = min(tk, _round_up(f_in, 128))
    tn_e = min(tn, _round_up(f_out, 128))

    # Pad each dim up to a whole number of tiles.  Zero padding is exact for an
    # affine map: padded K columns contribute 0, padded rows/cols are sliced
    # off at the end.  Skip the pad ops entirely when already aligned.
    n_p = _round_up(n, tm_e)
    k_p = _round_up(f_in, tk_e)
    m_p = _round_up(f_out, tn_e)

    x_p = x if (n_p == n and k_p == f_in) else jnp.pad(
        x, ((0, n_p - n), (0, k_p - f_in)))
    w_p = w if (k_p == f_in and m_p == f_out) else jnp.pad(
        w, ((0, k_p - f_in), (0, m_p - f_out)))
    b_p = b if m_p == f_out else jnp.pad(b, ((0, 0), (0, m_p - f_out)))

    x_p = x_p.astype(compute_dtype)
    w_p = w_p.astype(compute_dtype)
    b_p = b_p.astype(jnp.float32)

    grid = (n_p // tm_e, m_p // tn_e, k_p // tk_e)

    cost = pl.CostEstimate(
        flops=2 * n_p * k_p * m_p,
        transcendentals=0,
        bytes_accessed=(
            x_p.size * x_p.dtype.itemsize
            + w_p.size * w_p.dtype.itemsize
            + b_p.size * b_p.dtype.itemsize
            + n_p * m_p * jnp.dtype(out_dtype).itemsize
        ),
    )

    out = pl.pallas_call(
        _tiled_affine_kernel,
        out_shape=jax.ShapeDtypeStruct((n_p, m_p), out_dtype),
        grid_spec=pltpu.PrefetchScalarGridSpec(
            num_scalar_prefetch=0,
            grid=grid,
            in_specs=[
                # x tile depends on (i, k)
                pl.BlockSpec((tm_e, tk_e), lambda i, j, k: (i, k)),
                # w tile depends on (k, j)
                pl.BlockSpec((tk_e, tn_e), lambda i, j, k: (k, j)),
                # bias tile depends on j only: constant block index across k,
                # so it stays resident and is not re-fetched per reduction step
                pl.BlockSpec((1, tn_e), lambda i, j, k: (0, j)),
            ],
            # output block constant across k -> stays resident as accumulator
            out_specs=pl.BlockSpec((tm_e, tn_e), lambda i, j, k: (i, j)),
            scratch_shapes=[pltpu.VMEM((tm_e, tn_e), jnp.float32)],
        ),
        compiler_params=pltpu.CompilerParams(
            dimension_semantics=("parallel", "parallel", "arbitrary"),
            vmem_limit_bytes=vmem_limit_bytes,
        ),
        cost_estimate=cost,
    )(x_p, w_p, b_p)

    if n_p == n and m_p == f_out:
        return out
    return out[:n, :f_out]


class ExternalLayerPallas:
    """Mirror of ExternalLayer's constructor contract, with a deterministic
    synthetic external_network (affine map) run through the Pallas kernel."""

    def __init__(self, input_dims=None, num_filters=None, output_dims=None, **kwargs):
        assert input_dims is not None, "ExternalLayer: input_dims must be specified."
        assert num_filters is not None, "ExternalLayer: num_filters must be specified."
        assert output_dims is not None, "ExternalLayer: output_dims must be specified."
        self.input_dims = list(input_dims)    # (C, H, W, lags)
        self.num_filters = num_filters
        self.filter_dims = [0, 0, 0, 0]
        self.output_dims = list(output_dims)  # (C, H, W, lags)
        self.reg = None

        f_in = 1
        for d in self.input_dims:
            f_in *= int(d)
        f_out = 1
        for d in self.output_dims:
            f_out *= int(d)
        self.f_in = f_in
        self.f_out = f_out

        # Deterministic parameter init (synthetic stand-in for external_network).
        kw, kb = jax.random.split(jax.random.PRNGKey(0))
        scale = 1.0 / jnp.sqrt(jnp.float32(f_in))
        self.w = jax.random.normal(kw, (f_in, f_out), dtype=jnp.float32) * scale
        self.b = jax.random.normal(kb, (1, f_out), dtype=jnp.float32) * 0.01

    def __call__(self, x):
        # x: (N, prod(input_dims)) flattened, NDN convention.
        return external_layer_forward(x, self.w, self.b)


if __name__ == "__main__":
    # Small shapes consistent with the module's (C, H, W, lags) dims convention.
    # f_in = 1024 exercises the K-tiled reduction (2 steps at tk=512);
    # f_out = 256 is one lane-dense output tile.
    input_dims = (8, 8, 8, 2)     # -> 1024 flattened features
    output_dims = (8, 4, 4, 2)    # -> 256 flattened outputs
    num_filters = 8
    batch = 16

    layer = ExternalLayerPallas(
        input_dims=input_dims, num_filters=num_filters, output_dims=output_dims
    )

    x = jax.random.normal(
        jax.random.PRNGKey(0), (batch, layer.f_in), dtype=jnp.float32
    )

    y = jax.block_until_ready(layer(x))

    # Reference with the same bf16-inputs / f32-accumulate numerics.
    y_ref = (
        jnp.dot(
            x.astype(jnp.bfloat16),
            layer.w.astype(jnp.bfloat16),
            preferred_element_type=jnp.float32,
        )
        + layer.b
    )
    assert y.shape == (batch, layer.f_out), y.shape
    assert jnp.allclose(y, y_ref, atol=1e-2, rtol=1e-2)

    print("KERNEL_OK")
</pallas_src>

<mosaic_0001>
module attributes {stable_mosaic.version = 11 : i64} {
  func.func @_tiled_affine_kernel(%arg0: i32, %arg1: i32, %arg2: i32, %arg3: memref<16x512xbf16, #tpu.memory_space<vmem>>, %arg4: memref<512x256xbf16, #tpu.memory_space<vmem>>, %arg5: memref<1x256xf32, #tpu.memory_space<vmem>>, %arg6: memref<16x256xf32, #tpu.memory_space<vmem>>, %arg7: memref<16x256xf32, #tpu.memory_space<vmem>>) attributes {dimension_semantics = [#tpu.dimension_semantics<parallel>, #tpu.dimension_semantics<parallel>, #tpu.dimension_semantics<arbitrary>], iteration_bounds = array<i64: 1, 1, 2>, scalar_prefetch = 0 : i64, scratch_operands = 1 : i64, tpu.core_type = #tpu.core_type<tc>, window_params = [{transform_indices = @transform_0, window_bounds = array<i64: 16, 512>}, {transform_indices = @transform_1, window_bounds = array<i64: 512, 256>}, {transform_indices = @transform_2, window_bounds = array<i64: 1, 256>}, {transform_indices = @transform_3, window_bounds = array<i64: 16, 256>}]} {
    %c0_i32 = arith.constant 0 : i32
    %0 = arith.cmpi eq, %arg2, %c0_i32 : i32
    %1 = arith.extui %0 : i1 to i32
    %c0_i32_0 = arith.constant 0 : i32
    %2 = arith.cmpi ne, %1, %c0_i32_0 : i32
    scf.if %2 {
      %cst_9 = arith.constant 0.000000e+00 : f32
      %12 = vector.broadcast %cst_9 : f32 to vector<16x256xf32>
      %c0_10 = arith.constant 0 : index
      %c0_11 = arith.constant 0 : index
      %13 = vector.load %arg7[%c0_10, %c0_11] : memref<16x256xf32, #tpu.memory_space<vmem>>, vector<16x256xf32>
      tpu.vector_store %arg7[%c0_10, %c0_11], %12 {strides = array<i32>} : memref<16x256xf32, #tpu.memory_space<vmem>>, vector<16x256xf32>,
    } else {
    }
    %c0 = arith.constant 0 : index
    %c0_1 = arith.constant 0 : index
    %3 = vector.load %arg7[%c0, %c0_1] : memref<16x256xf32, #tpu.memory_space<vmem>>, vector<16x256xf32>
    %c0_2 = arith.constant 0 : index
    %c0_3 = arith.constant 0 : index
    %4 = vector.load %arg3[%c0_2, %c0_3] : memref<16x512xbf16, #tpu.memory_space<vmem>>, vector<16x512xbf16>
    %c0_4 = arith.constant 0 : index
    %c0_5 = arith.constant 0 : index
    %5 = vector.load %arg4[%c0_4, %c0_5] : memref<512x256xbf16, #tpu.memory_space<vmem>>, vector<512x256xbf16>
    %cst = arith.constant dense<0.000000e+00> : vector<16x256xf32>
    %6 = tpu.matmul %4, %5, %cst {dimension_numbers = #tpu.dot_dimension_numbers<[1], [0], [0], [1], [0, 0, 1, 1], [], []>} : vector<16x512xbf16>, vector<512x256xbf16>, vector<16x256xf32> -> vector<16x256xf32>
    %7 = arith.addf %3, %6 : vector<16x256xf32>
    %c0_6 = arith.constant 0 : index
    %c0_7 = arith.constant 0 : index
    %8 = vector.load %arg7[%c0_6, %c0_7] : memref<16x256xf32, #tpu.memory_space<vmem>>, vector<16x256xf32>
    tpu.vector_store %arg7[%c0_6, %c0_7], %7 {strides = array<i32>} : memref<16x256xf32, #tpu.memory_space<vmem>>, vector<16x256xf32>,
    %c1_i32 = arith.constant 1 : i32
    %9 = arith.cmpi eq, %arg2, %c1_i32 : i32
    %10 = arith.extui %9 : i1 to i32
    %c0_i32_8 = arith.constant 0 : i32
    %11 = arith.cmpi ne, %10, %c0_i32_8 : i32
    scf.if %11 {
      %c0_9 = arith.constant 0 : index
      %c0_10 = arith.constant 0 : index
      %12 = vector.load %arg7[%c0_9, %c0_10] : memref<16x256xf32, #tpu.memory_space<vmem>>, vector<16x256xf32>
      %c0_11 = arith.constant 0 : index
      %c0_12 = arith.constant 0 : index
      %13 = vector.load %arg5[%c0_11, %c0_12] : memref<1x256xf32, #tpu.memory_space<vmem>>, vector<1x256xf32>
      %14 = vector.broadcast %13 : vector<1x256xf32> to vector<16x256xf32>
      %15 = arith.addf %12, %14 : vector<16x256xf32>
      %c0_13 = arith.constant 0 : index
      %c0_14 = arith.constant 0 : index
      %16 = vector.load %arg6[%c0_13, %c0_14] : memref<16x256xf32, #tpu.memory_space<vmem>>, vector<16x256xf32>
      tpu.vector_store %arg6[%c0_13, %c0_14], %15 {strides = array<i32>} : memref<16x256xf32, #tpu.memory_space<vmem>>, vector<16x256xf32>,
    } else {
    }
    return
  }
  func.func @transform_0(%arg0: i32, %arg1: i32, %arg2: i32) -> (i32, i32) {
    %c0_i32 = arith.constant 0 : i32
    return %arg0, %arg2 : i32, i32
  }
  func.func @transform_1(%arg0: i32, %arg1: i32, %arg2: i32) -> (i32, i32) {
    %c0_i32 = arith.constant 0 : i32
    return %arg2, %arg1 : i32, i32
  }
  func.func @transform_2(%arg0: i32, %arg1: i32, %arg2: i32) -> (i32, i32) {
    %c0_i32 = arith.constant 0 : i32
    %c0_i32_0 = arith.constant 0 : i32
    return %c0_i32, %arg1 : i32, i32
  }
  func.func @transform_3(%arg0: i32, %arg1: i32, %arg2: i32) -> (i32, i32) {
    %c0_i32 = arith.constant 0 : i32
    return %arg0, %arg1 : i32, i32
  }
}

</mosaic_0001>

<llo_original>
// kernel: tpu_custom_call.1
$region0: #{tpu_custom_call.1}
  #allocation0 [shape = 'u32[]', space=smem, size = 0x4, offset = 0x4, fixed_abs, tag = 'smem constant byte address 0x4 - core index']
  #allocation1 [shape = 'u32[144,128]{1,0:T(1,128)}', space=vmem, size = 0x12000, scoped, tag = 'internal scratch']
  #allocation2 [shape = 'f32[16,256]{1,0:T(8,128)}', space=vmem, size = 0x4000, scoped, tag = 'scratch operand']
  %s0 = inlined_call_operand.hbm [shape: bf16[16,1024], index: 0, kind: input, shape index: {}]
  %s1 = inlined_call_operand.hbm [shape: bf16[1024,256], index: 1, kind: input, shape index: {}]
  %s2 = inlined_call_operand.vmem [shape: f32[1,256], index: 2, kind: input, shape index: {}]
  %s3 = inlined_call_operand.hbm [shape: f32[16,256], index: 3, kind: output, shape index: {}]
  %s4 = sld [smem:[#allocation0]]
  $region61: #{tpu_custom_call.1} parent=0
    _
  %s6 = ssub.s32 1, %s4
  %s7 = scalar_select 0, %s6, %s4
  $region1: #{tpu_custom_call.1} parent=0
    #allocation3 [shape = 'u8[32768]{0}', space=vmem, size = 0x8000, scoped, tag = 'input window, operand 0']
    #allocation4 [shape = 's32[2]{0}', space=sflag, size = 0x8, scoped, tag = 'scoped memory for tpu_custom_call.1']
    #allocation5 [shape = 's32[2]{0}', space=sflag, size = 0x8, scoped, tag = 'scoped memory for tpu_custom_call.1']
    #allocation6 [shape = 'u8[524288]{0}', space=vmem, size = 0x80000, scoped, tag = 'input window, operand 1']
    #allocation7 [shape = 's32[2]{0}', space=sflag, size = 0x8, scoped, tag = 'scoped memory for tpu_custom_call.1']
    #allocation8 [shape = 'u8[16384]{0}', space=vmem, size = 0x4000, scoped, tag = 'output window, operand 0, single buffered']
    %8 = vsyncpa [#allocation4], 0
    %s9 = scalar_lea.sflag [#allocation4], 1
    %10 = vsyncpa %s9, 0
    %11 = vsyncpa [#allocation7], 0
    %s12 = scalar_lea.sflag [#allocation7], 1
    %13 = vsyncpa %s12, 0
    %14 = vsyncpa [#allocation5], 0
    loop: start=0, step=1, limit=4
    $region2: #{tpu_custom_call.1} parent=1 // loop_pre_header
      _
    $region3: #{tpu_custom_call.1} parent=1 // loop_header
      %s16 = sphi 0, %s20
      %p17 = scmp.ge.s32.totalorder %s16, 4
      %s23 = sphi 0, %s42
      %s24 = sphi 0, %s38
      %s25 = sphi 0, %s34
      %s26 = sphi 0, %s23
      %s27 = sphi 0, %s24
      %s28 = sphi 0, %s25
      %s29 = sphi 0, %s26
      %s30 = sphi 0, %s27
      %s31 = sphi 0, %s28
      %s47 = sphi 0, %s49
      %s50 = sphi 0, %s47
      %s51 = sphi 0, %s50
      %s67 = sphi 0, %s51
      %s75 = sphi 0, %s77
      %s78 = sphi 0, %s75
      %s79 = sphi 0, %s78
      %s95 = sphi 0, %s79
      %s101 = sphi 0, %s103
      %s104 = sphi 0, %s101
      %s105 = sphi 0, %s104
      %s121 = sphi 0, %s105
      %s129 = sphi 0, %s131
      %s132 = sphi 0, %s129
      %s133 = sphi 0, %s132
      %s149 = sphi 0, %s133
    $region4: #{tpu_custom_call.1} parent=1 // loop_header_branch
      %19 = sbr.rel (%p17) target = $region8
    $region5: #{tpu_custom_call.1} parent=1 // loop_body
      %s21 = ssub.s32 %s16, 1
      %s22 = ssub.s32 %s16, 2
      %s32 = sadd.s32 1, %s25
      %p33 = scmp.ge.s32.totalorder %s32, 2
      %s34 = scalar_select %p33, 0, %s32
      %s35 = sadd.s32 1, %s24
      %s36 = scalar_select %p33, %s35, %s24
      %p37 = scmp.ge.s32.totalorder %s36, 1
      %s38 = scalar_select %p37, 0, %s36
      %s39 = sadd.s32 1, %s23
      %s40 = scalar_select %p37, %s39, %s23
      %p41 = scmp.ge.s32.totalorder %s40, 1
      %s42 = scalar_select %p41, 0, %s40
      %s43 = ssub.s32 %s23, %s42
      %s44 = ssub.s32 %s25, %s34
      %s45 = sor.u32 %s43, %s44
      %p46 = scmp.eq.s32.totalorder %s45, 0
      %s48 = sadd.s32 %s47, 1
      %s49 = scalar_select %p46, %s47, %s48
      %p52 = pneg %p46
      %p53 = scmp.eq.s32.totalorder %s16, 1
      %p54 = por %p52, %p53
      %p55 = scmp.ne.s32.totalorder %s47, %s50
      %p56 = scmp.eq.s32.totalorder %s16, 0
      %p57 = por %p55, %p56
      %p58 = scmp.ne.s32.totalorder %s47, %s50
      %p59 = scmp.eq.s32.totalorder %s21, 1
      %p60 = por %p58, %p59
      %p61 = scmp.ne.s32.totalorder %s50, %s51
      %p62 = scmp.eq.s32.totalorder %s21, 0
      %p63 = por %p61, %p62
      %p64 = scmp.ne.s32.totalorder %s50, %s51
      %p65 = scmp.eq.s32.totalorder %s22, 1
      %p66 = por %p64, %p65
      %p68 = scmp.ne.s32.totalorder %s51, %s67
      %p69 = scmp.eq.s32.totalorder %s22, 0
      %p70 = por %p68, %p69
      %s71 = ssub.s32 %s25, %s34
      %s72 = ssub.s32 %s24, %s38
      %s73 = sor.u32 %s71, %s72
      %p74 = scmp.eq.s32.totalorder %s73, 0
      %s76 = sadd.s32 %s75, 1
      %s77 = scalar_select %p74, %s75, %s76
      %p80 = pneg %p74
      %p81 = scmp.eq.s32.totalorder %s16, 1
      %p82 = por %p80, %p81
      %p83 = scmp.ne.s32.totalorder %s75, %s78
      %p84 = scmp.eq.s32.totalorder %s16, 0
      %p85 = por %p83, %p84
      %p86 = scmp.ne.s32.totalorder %s75, %s78
      %p87 = scmp.eq.s32.totalorder %s21, 1
      %p88 = por %p86, %p87
      %p89 = scmp.ne.s32.totalorder %s78, %s79
      %p90 = scmp.eq.s32.totalorder %s21, 0
      %p91 = por %p89, %p90
      %p92 = scmp.ne.s32.totalorder %s78, %s79
      %p93 = scmp.eq.s32.totalorder %s22, 1
      %p94 = por %p92, %p93
      %p96 = scmp.ne.s32.totalorder %s79, %s95
      %p97 = scmp.eq.s32.totalorder %s22, 0
      %p98 = por %p96, %p97
      %s99 = ssub.s32 %s24, %s38
      %p100 = scmp.eq.s32.totalorder %s99, 0
      %s102 = sadd.s32 %s101, 1
      %s103 = scalar_select %p100, %s101, %s102
      %p106 = pneg %p100
      %p107 = scmp.eq.s32.totalorder %s16, 1
      %p108 = por %p106, %p107
      %p109 = scmp.ne.s32.totalorder %s101, %s104
      %p110 = scmp.eq.s32.totalorder %s16, 0
      %p111 = por %p109, %p110
      %p112 = scmp.ne.s32.totalorder %s101, %s104
      %p113 = scmp.eq.s32.totalorder %s21, 1
      %p114 = por %p112, %p113
      %p115 = scmp.ne.s32.totalorder %s104, %s105
      %p116 = scmp.eq.s32.totalorder %s21, 0
      %p117 = por %p115, %p116
      %p118 = scmp.ne.s32.totalorder %s104, %s105
      %p119 = scmp.eq.s32.totalorder %s22, 1
      %p120 = por %p118, %p119
      %p122 = scmp.ne.s32.totalorder %s105, %s121
      %p123 = scmp.eq.s32.totalorder %s22, 0
      %p124 = por %p122, %p123
      %s125 = ssub.s32 %s23, %s42
      %s126 = ssub.s32 %s24, %s38
      %s127 = sor.u32 %s125, %s126
      %p128 = scmp.eq.s32.totalorder %s127, 0
      %s130 = sadd.s32 %s129, 1
      %s131 = scalar_select %p128, %s129, %s130
      %p134 = pneg %p128
      %p135 = scmp.eq.s32.totalorder %s16, 1
      %p136 = por %p134, %p135
      %p137 = scmp.ne.s32.totalorder %s129, %s132
      %p138 = scmp.eq.s32.totalorder %s16, 0
      %p139 = por %p137, %p138
      %p140 = scmp.ne.s32.totalorder %s129, %s132
      %p141 = scmp.eq.s32.totalorder %s21, 1
      %p142 = por %p140, %p141
      %p143 = scmp.ne.s32.totalorder %s132, %s133
      %p144 = scmp.eq.s32.totalorder %s21, 0
      %p145 = por %p143, %p144
      %p146 = scmp.ne.s32.totalorder %s132, %s133
      %p147 = scmp.eq.s32.totalorder %s22, 1
      %p148 = por %p146, %p147
      %p150 = scmp.ne.s32.totalorder %s133, %s149
      %p151 = scmp.eq.s32.totalorder %s22, 0
      %p152 = por %p150, %p151
      %p153 = scmp.le.s32.totalorder 1, %s16
      %p154 = scmp.lt.s32.totalorder %s16, 3
      %p155 = pnand %p153, %p154
      %p156 = pneg %p155
      // Predicated region
      $region9: #{tpu_custom_call.1} parent=5 // pred_check
        _
      $region10: #{tpu_custom_call.1} parent=5 // pred_check_branch
        %158 = sbr.rel (%p155) target = $region12
      $region11: #{tpu_custom_call.1} parent=5 // pred_region
        %s159 = ssub.s32 %s16, 1
        // Predicated region
        $region13: #{tpu_custom_call.1} parent=11 // pred_check
          %p160 = pneg %p117
        $region14: #{tpu_custom_call.1} parent=11 // pred_check_branch
          %162 = sbr.rel (%p160) target = $region16
        $region15: #{tpu_custom_call.1} parent=11 // pred_region
          %s163 = smul.u32 2, %s27
          %p164 = scmp.lt.s32.totalorder %s163, 1
          %s165 = scalar_select %p164, %s163, 1
          %s166 = scalar_lea.vmem %s2, %s165
          %s167 = smul.u32 2, %s27
        $region16: #{tpu_custom_call.1} parent=11 // pred_fallthru
          _
      $region12: #{tpu_custom_call.1} parent=5 // pred_fallthru
        _
      %p168 = scmp.lt.s32.totalorder %s16, 2
      // Predicated region
      $region17: #{tpu_custom_call.1} parent=5 // pred_check
        %p169 = pneg %p168
      $region18: #{tpu_custom_call.1} parent=5 // pred_check_branch
        %171 = sbr.rel (%p169) target = $region20
      $region19: #{tpu_custom_call.1} parent=5 // pred_region
        // Predicated region
        $region21: #{tpu_custom_call.1} parent=19 // pred_check
          %p172 = pneg %p57
        $region22: #{tpu_custom_call.1} parent=19 // pred_check_branch
          %174 = sbr.rel (%p172) target = $region24
        $region23: #{tpu_custom_call.1} parent=19 // pred_region
          %s175 = sand.u32 %s47, 1
          %s176 = scalar_lea.sflag [#allocation4], %s175
          %s177 = sand.u32 %s47, 1
          %s178 = smul.addr %s177, 32
          %s179 = scalar_lea.vmem [#allocation3], %s178
          %s180 = smul.u32 2, %s23
          %s181 = smul.u32 4, %s25
          %s183 = ssub.s32 512, 512
          %184 = vsyncadd %s176, %s183
          %s185 = smul.addr %s180, 8
          %s186 = sadd.s32 %s181, %s185
          %s187 = smul.addr %s186, 64
          %s188 = scalar_lea.hbm %s0, %s187
          %s189 = sshll.u32 %s179, 4
          %s190 = int_to_ptr.vmem [resolvable:$true] %s189
          %195 = dma.hbm_to_vmem [thread:$0]  %s188, 512, %s190, %s176, 512, 256, 16
        $region24: #{tpu_custom_call.1} parent=19 // pred_fallthru
          _
        // Predicated region
        $region25: #{tpu_custom_call.1} parent=19 // pred_check
          %p196 = pneg %p85
        $region26: #{tpu_custom_call.1} parent=19 // pred_check_branch
          %198 = sbr.rel (%p196) target = $region28
        $region27: #{tpu_custom_call.1} parent=19 // pred_region
          %s199 = sand.u32 %s75, 1
          %s200 = scalar_lea.sflag [#allocation7], %s199
          %s201 = sand.u32 %s75, 1
          %s202 = smul.addr %s201, 512
          %s203 = scalar_lea.vmem [#allocation6], %s202
          %s204 = smul.u32 64, %s25
          %s205 = smul.u32 2, %s24
          %s207 = ssub.s32 8192, 8192
          %208 = vsyncadd %s200, %s207
          %s209 = smul.addr %s204, 2
          %s210 = sadd.s32 %s205, %s209
          %s211 = smul.addr %s210, 64
          %s212 = scalar_lea.hbm %s1, %s211
          %s213 = sshll.u32 %s203, 4
          %s214 = int_to_ptr.vmem [resolvable:$true] %s213
          %219 = dma.hbm_to_vmem [thread:$0]  %s212, 8192, %s214, %s200, 128, 128, 8
        $region28: #{tpu_custom_call.1} parent=19 // pred_fallthru
          _
      $region20: #{tpu_custom_call.1} parent=5 // pred_fallthru
        _
      %p220 = scmp.le.s32.totalorder 1, %s16
      %p221 = scmp.lt.s32.totalorder %s16, 3
      %p222 = pnand %p220, %p221
      %p223 = pneg %p222
      // Predicated region
      $region29: #{tpu_custom_call.1} parent=5 // pred_check
        _
      $region30: #{tpu_custom_call.1} parent=5 // pred_check_branch
        %225 = sbr.rel (%p222) target = $region32
      $region31: #{tpu_custom_call.1} parent=5 // pred_region
        %s226 = ssub.s32 %s16, 1
        %s227 = sand.u32 %s50, 1
        %s228 = scalar_lea.sflag [#allocation4], %s227
        %s229 = sand.u32 %s50, 1
        %s230 = smul.addr %s229, 32
        %s231 = scalar_lea.vmem [#allocation3], %s230
        // Predicated region
        $region33: #{tpu_custom_call.1} parent=31 // pred_check
          %p232 = pneg %p63
        $region34: #{tpu_custom_call.1} parent=31 // pred_check_branch
          %234 = sbr.rel (%p232) target = $region36
        $region35: #{tpu_custom_call.1} parent=31 // pred_region
          %235 = dma.done %s228, 512
        $region36: #{tpu_custom_call.1} parent=31 // pred_fallthru
          _
        %s236 = sand.u32 %s78, 1
        %s237 = scalar_lea.sflag [#allocation7], %s236
        %s238 = sand.u32 %s78, 1
        %s239 = smul.addr %s238, 512
        %s240 = scalar_lea.vmem [#allocation6], %s239
        // Predicated region
        $region37: #{tpu_custom_call.1} parent=31 // pred_check
          %p241 = pneg %p91
        $region38: #{tpu_custom_call.1} parent=31 // pred_check_branch
          %243 = sbr.rel (%p241) target = $region40
        $region39: #{tpu_custom_call.1} parent=31 // pred_region
          %244 = dma.done %s237, 8192
        $region40: #{tpu_custom_call.1} parent=31 // pred_fallthru
          _
        %s245 = sand.u32 %s50, 1
        %s246 = scalar_lea.sflag [#allocation4], %s245
        %s247 = sand.u32 %s50, 1
        %s248 = smul.addr %s247, 32
        %s249 = scalar_lea.vmem [#allocation3], %s248
        %p250 = pneg %p63
        %p251 = pneg %p60
        %s252 = sand.u32 %s78, 1
        %s253 = scalar_lea.sflag [#allocation7], %s252
        %s254 = sand.u32 %s78, 1
        %s255 = smul.addr %s254, 512
        %s256 = scalar_lea.vmem [#allocation6], %s255
        %p257 = pneg %p91
        %p258 = pneg %p88
        %s259 = smul.u32 2, %s27
        %p260 = scmp.lt.s32.totalorder %s259, 1
        %s261 = scalar_select %p260, %s259, 1
        %s262 = scalar_lea.vmem %s2, %s261
        %p263 = pneg %p117
        %p264 = pneg %p114
        %p265 = pneg %p145
        %p266 = pneg %p142
        %s267 = smul.u32 2, %s26
        %s268 = smul.u32 4, %s28
        %s269 = smul.u32 64, %s28
        %s270 = smul.u32 2, %s27
        %s271 = smul.u32 2, %s27
        %p272 = scmp.lt.s32.totalorder %s271, 1
        %s273 = scalar_select %p272, %s271, 1
        %s274 = scalar_lea.vmem %s2, %s273
        %s275 = smul.u32 2, %s27
        %s276 = smul.u32 2, %s26
        %s277 = smul.u32 2, %s27
        %p278 = scmp.eq.s32.totalorder %s28, 0
        // Predicated region
        $region41: #{tpu_custom_call.1} parent=31 // pred_check
          %p279 = pneg %p278
        $region42: #{tpu_custom_call.1} parent=31 // pred_check_branch
          %281 = sbr.rel (%p279) target = $region44
        $region43: #{tpu_custom_call.1} parent=31 // pred_region
          %282 = vst [vmem:[#allocation2] sm:$0xff] 0.0
          %283 = vst [vmem:[#allocation2 + $0x8] sm:$0xff] 0.0
          %284 = vst [vmem:[#allocation2 + $0x10] sm:$0xff] 0.0
          %285 = vst [vmem:[#allocation2 + $0x18] sm:$0xff] 0.0
        $region44: #{tpu_custom_call.1} parent=31 // pred_fallthru
          _
        %v286 = vld [vmem:[#allocation2] sm:$0xff]
        %v287 = vld [vmem:[#allocation2 + $0x8] sm:$0xff]
        %v288 = vld [vmem:[#allocation2 + $0x10] sm:$0xff]
        %v289 = vld [vmem:[#allocation2 + $0x18] sm:$0xff]
        %v290 = vld [vmem:[%s231] sm:$0xff]
        %v291 = vld [vmem:[%s231 + $0x8] sm:$0xff]
        %v292 = vld [vmem:[%s231 + $0x10] sm:$0xff]
        %v293 = vld [vmem:[%s231 + $0x18] sm:$0xff]
        %v294 = vld [vmem:[%s240] sm:$0xff]
        %v295 = vld [vmem:[%s240 + $0x8] sm:$0xff]
        %v296 = vld [vmem:[%s240 + $0x10] sm:$0xff]
        %v297 = vld [vmem:[%s240 + $0x18] sm:$0xff]
        %v298 = vld [vmem:[%s240 + $0x20] sm:$0xff]
        %v299 = vld [vmem:[%s240 + $0x28] sm:$0xff]
        %v300 = vld [vmem:[%s240 + $0x30] sm:$0xff]
        %v301 = vld [vmem:[%s240 + $0x38] sm:$0xff]
        %v302 = vld [vmem:[%s240 + $0x40] sm:$0xff]
        %v303 = vld [vmem:[%s240 + $0x48] sm:$0xff]
        %v304 = vld [vmem:[%s240 + $0x50] sm:$0xff]
        %v305 = vld [vmem:[%s240 + $0x58] sm:$0xff]
        %v306 = vld [vmem:[%s240 + $0x60] sm:$0xff]
        %v307 = vld [vmem:[%s240 + $0x68] sm:$0xff]
        %v308 = vld [vmem:[%s240 + $0x70] sm:$0xff]
        %v309 = vld [vmem:[%s240 + $0x78] sm:$0xff]
        %v310 = vld [vmem:[%s240 + $0x80] sm:$0xff]
        %v311 = vld [vmem:[%s240 + $0x88] sm:$0xff]
        %v312 = vld [vmem:[%s240 + $0x90] sm:$0xff]
        %v313 = vld [vmem:[%s240 + $0x98] sm:$0xff]
        %v314 = vld [vmem:[%s240 + $0xa0] sm:$0xff]
        %v315 = vld [vmem:[%s240 + $0xa8] sm:$0xff]
        %v316 = vld [vmem:[%s240 + $0xb0] sm:$0xff]
        %v317 = vld [vmem:[%s240 + $0xb8] sm:$0xff]
        %v318 = vld [vmem:[%s240 + $0xc0] sm:$0xff]
        %v319 = vld [vmem:[%s240 + $0xc8] sm:$0xff]
        %v320 = vld [vmem:[%s240 + $0xd0] sm:$0xff]
        %v321 = vld [vmem:[%s240 + $0xd8] sm:$0xff]
        %v322 = vld [vmem:[%s240 + $0xe0] sm:$0xff]
        %v323 = vld [vmem:[%s240 + $0xe8] sm:$0xff]
        %v324 = vld [vmem:[%s240 + $0xf0] sm:$0xff]
        %v325 = vld [vmem:[%s240 + $0xf8] sm:$0xff]
        %v326 = vld [vmem:[%s240 + $0x100] sm:$0xff]
        %v327 = vld [vmem:[%s240 + $0x108] sm:$0xff]
        %v328 = vld [vmem:[%s240 + $0x110] sm:$0xff]
        %v329 = vld [vmem:[%s240 + $0x118] sm:$0xff]
        %v330 = vld [vmem:[%s240 + $0x120] sm:$0xff]
        %v331 = vld [vmem:[%s240 + $0x128] sm:$0xff]
        %v332 = vld [vmem:[%s240 + $0x130] sm:$0xff]
        %v333 = vld [vmem:[%s240 + $0x138] sm:$0xff]
        %v334 = vld [vmem:[%s240 + $0x140] sm:$0xff]
        %v335 = vld [vmem:[%s240 + $0x148] sm:$0xff]
        %v336 = vld [vmem:[%s240 + $0x150] sm:$0xff]
        %v337 = vld [vmem:[%s240 + $0x158] sm:$0xff]
        %v338 = vld [vmem:[%s240 + $0x160] sm:$0xff]
        %v339 = vld [vmem:[%s240 + $0x168] sm:$0xff]
        %v340 = vld [vmem:[%s240 + $0x170] sm:$0xff]
        %v341 = vld [vmem:[%s240 + $0x178] sm:$0xff]
        %v342 = vld [vmem:[%s240 + $0x180] sm:$0xff]
        %v343 = vld [vmem:[%s240 + $0x188] sm:$0xff]
        %v344 = vld [vmem:[%s240 + $0x190] sm:$0xff]
        %v345 = vld [vmem:[%s240 + $0x198] sm:$0xff]
        %v346 = vld [vmem:[%s240 + $0x1a0] sm:$0xff]
        %v347 = vld [vmem:[%s240 + $0x1a8] sm:$0xff]
        %v348 = vld [vmem:[%s240 + $0x1b0] sm:$0xff]
        %v349 = vld [vmem:[%s240 + $0x1b8] sm:$0xff]
        %v350 = vld [vmem:[%s240 + $0x1c0] sm:$0xff]
        %v351 = vld [vmem:[%s240 + $0x1c8] sm:$0xff]
        %v352 = vld [vmem:[%s240 + $0x1d0] sm:$0xff]
        %v353 = vld [vmem:[%s240 + $0x1d8] sm:$0xff]
        %v354 = vld [vmem:[%s240 + $0x1e0] sm:$0xff]
        %v355 = vld [vmem:[%s240 + $0x1e8] sm:$0xff]
        %v356 = vld [vmem:[%s240 + $0x1f0] sm:$0xff]
        %v357 = vld [vmem:[%s240 + $0x1f8] sm:$0xff]
        %v362 = vunpack.c.l.b16 %v290
        %v363 = vunpack.c.h.b16 %v290
        %v364 = vunpack.c.l.b16 %v291
        %v365 = vunpack.c.h.b16 %v291
        %v366 = vunpack.c.l.b16 %v292
        %v367 = vunpack.c.h.b16 %v292
        %v368 = vunpack.c.l.b16 %v293
        %v369 = vunpack.c.h.b16 %v293
        %v370 = vpack.c.b16 %v366, %v362
        %v371 = vpack.c.b16 %v367, %v363
        %v372 = vpack.c.b16 %v368, %v364
        %v373 = vpack.c.b16 %v369, %v365
        %v442 = vunpack.c.l.b16 %v294
        %v443 = vunpack.c.h.b16 %v294
        %v444 = vunpack.c.l.b16 %v295
        %v445 = vunpack.c.h.b16 %v295
        %v446 = vunpack.c.l.b16 %v296
        %v447 = vunpack.c.h.b16 %v296
        %v448 = vunpack.c.l.b16 %v297
        %v449 = vunpack.c.h.b16 %v297
        %v450 = vunpack.c.l.b16 %v298
        %v451 = vunpack.c.h.b16 %v298
        %v452 = vunpack.c.l.b16 %v299
        %v453 = vunpack.c.h.b16 %v299
        %v454 = vunpack.c.l.b16 %v300
        %v455 = vunpack.c.h.b16 %v300
        %v456 = vunpack.c.l.b16 %v301
        %v457 = vunpack.c.h.b16 %v301
        %v458 = vunpack.c.l.b16 %v302
        %v459 = vunpack.c.h.b16 %v302
        %v460 = vunpack.c.l.b16 %v303
        %v461 = vunpack.c.h.b16 %v303
        %v462 = vunpack.c.l.b16 %v304
        %v463 = vunpack.c.h.b16 %v304
        %v464 = vunpack.c.l.b16 %v305
        %v465 = vunpack.c.h.b16 %v305
        %v466 = vunpack.c.l.b16 %v306
        %v467 = vunpack.c.h.b16 %v306
        %v468 = vunpack.c.l.b16 %v307
        %v469 = vunpack.c.h.b16 %v307
        %v470 = vunpack.c.l.b16 %v308
        %v471 = vunpack.c.h.b16 %v308
        %v472 = vunpack.c.l.b16 %v309
        %v473 = vunpack.c.h.b16 %v309
        %v474 = vunpack.c.l.b16 %v310
        %v475 = vunpack.c.h.b16 %v310
        %v476 = vunpack.c.l.b16 %v311
        %v477 = vunpack.c.h.b16 %v311
        %v478 = vunpack.c.l.b16 %v312
        %v479 = vunpack.c.h.b16 %v312
        %v480 = vunpack.c.l.b16 %v313
        %v481 = vunpack.c.h.b16 %v313
        %v482 = vunpack.c.l.b16 %v314
        %v483 = vunpack.c.h.b16 %v314
        %v484 = vunpack.c.l.b16 %v315
        %v485 = vunpack.c.h.b16 %v315
        %v486 = vunpack.c.l.b16 %v316
        %v487 = vunpack.c.h.b16 %v316
        %v488 = vunpack.c.l.b16 %v317
        %v489 = vunpack.c.h.b16 %v317
        %v490 = vunpack.c.l.b16 %v318
        %v491 = vunpack.c.h.b16 %v318
        %v492 = vunpack.c.l.b16 %v319
        %v493 = vunpack.c.h.b16 %v319
        %v494 = vunpack.c.l.b16 %v320
        %v495 = vunpack.c.h.b16 %v320
        %v496 = vunpack.c.l.b16 %v321
        %v497 = vunpack.c.h.b16 %v321
        %v498 = vunpack.c.l.b16 %v322
        %v499 = vunpack.c.h.b16 %v322
        %v500 = vunpack.c.l.b16 %v323
        %v501 = vunpack.c.h.b16 %v323
        %v502 = vunpack.c.l.b16 %v324
        %v503 = vunpack.c.h.b16 %v324
        %v504 = vunpack.c.l.b16 %v325
        %v505 = vunpack.c.h.b16 %v325
        %v506 = vunpack.c.l.b16 %v326
        %v507 = vunpack.c.h.b16 %v326
        %v508 = vunpack.c.l.b16 %v327
        %v509 = vunpack.c.h.b16 %v327
        %v510 = vunpack.c.l.b16 %v328
        %v511 = vunpack.c.h.b16 %v328
        %v512 = vunpack.c.l.b16 %v329
        %v513 = vunpack.c.h.b16 %v329
        %v514 = vunpack.c.l.b16 %v330
        %v515 = vunpack.c.h.b16 %v330
        %v516 = vunpack.c.l.b16 %v331
        %v517 = vunpack.c.h.b16 %v331
        %v518 = vunpack.c.l.b16 %v332
        %v519 = vunpack.c.h.b16 %v332
        %v520 = vunpack.c.l.b16 %v333
        %v521 = vunpack.c.h.b16 %v333
        %v522 = vunpack.c.l.b16 %v334
        %v523 = vunpack.c.h.b16 %v334
        %v524 = vunpack.c.l.b16 %v335
        %v525 = vunpack.c.h.b16 %v335
        %v526 = vunpack.c.l.b16 %v336
        %v527 = vunpack.c.h.b16 %v336
        %v528 = vunpack.c.l.b16 %v337
        %v529 = vunpack.c.h.b16 %v337
        %v530 = vunpack.c.l.b16 %v338
        %v531 = vunpack.c.h.b16 %v338
        %v532 = vunpack.c.l.b16 %v339
        %v533 = vunpack.c.h.b16 %v339
        %v534 = vunpack.c.l.b16 %v340
        %v535 = vunpack.c.h.b16 %v340
        %v536 = vunpack.c.l.b16 %v341
        %v537 = vunpack.c.h.b16 %v341
        %v538 = vunpack.c.l.b16 %v342
        %v539 = vunpack.c.h.b16 %v342
        %v540 = vunpack.c.l.b16 %v343
        %v541 = vunpack.c.h.b16 %v343
        %v542 = vunpack.c.l.b16 %v344
        %v543 = vunpack.c.h.b16 %v344
        %v544 = vunpack.c.l.b16 %v345
        %v545 = vunpack.c.h.b16 %v345
        %v546 = vunpack.c.l.b16 %v346
        %v547 = vunpack.c.h.b16 %v346
        %v548 = vunpack.c.l.b16 %v347
        %v549 = vunpack.c.h.b16 %v347
        %v550 = vunpack.c.l.b16 %v348
        %v551 = vunpack.c.h.b16 %v348
        %v552 = vunpack.c.l.b16 %v349
        %v553 = vunpack.c.h.b16 %v349
        %v554 = vunpack.c.l.b16 %v350
        %v555 = vunpack.c.h.b16 %v350
        %v556 = vunpack.c.l.b16 %v351
        %v557 = vunpack.c.h.b16 %v351
        %v558 = vunpack.c.l.b16 %v352
        %v559 = vunpack.c.h.b16 %v352
        %v560 = vunpack.c.l.b16 %v353
        %v561 = vunpack.c.h.b16 %v353
        %v562 = vunpack.c.l.b16 %v354
        %v563 = vunpack.c.h.b16 %v354
        %v564 = vunpack.c.l.b16 %v355
        %v565 = vunpack.c.h.b16 %v355
        %v566 = vunpack.c.l.b16 %v356
        %v567 = vunpack.c.h.b16 %v356
        %v568 = vunpack.c.l.b16 %v357
        %v569 = vunpack.c.h.b16 %v357
        %v570 = vpack.c.b16 %v444, %v442
        %v571 = vpack.c.b16 %v445, %v443
        %v572 = vpack.c.b16 %v448, %v446
        %v573 = vpack.c.b16 %v449, %v447
        %v574 = vpack.c.b16 %v452, %v450
        %v575 = vpack.c.b16 %v453, %v451
        %v576 = vpack.c.b16 %v456, %v454
        %v577 = vpack.c.b16 %v457, %v455
        %v578 = vpack.c.b16 %v460, %v458
        %v579 = vpack.c.b16 %v461, %v459
        %v580 = vpack.c.b16 %v464, %v462
        %v581 = vpack.c.b16 %v465, %v463
        %v582 = vpack.c.b16 %v468, %v466
        %v583 = vpack.c.b16 %v469, %v467
        %v584 = vpack.c.b16 %v472, %v470
        %v585 = vpack.c.b16 %v473, %v471
        %v586 = vpack.c.b16 %v476, %v474
        %v587 = vpack.c.b16 %v477, %v475
        %v588 = vpack.c.b16 %v480, %v478
        %v589 = vpack.c.b16 %v481, %v479
        %v590 = vpack.c.b16 %v484, %v482
        %v591 = vpack.c.b16 %v485, %v483
        %v592 = vpack.c.b16 %v488, %v486
        %v593 = vpack.c.b16 %v489, %v487
        %v594 = vpack.c.b16 %v492, %v490
        %v595 = vpack.c.b16 %v493, %v491
        %v596 = vpack.c.b16 %v496, %v494
        %v597 = vpack.c.b16 %v497, %v495
        %v598 = vpack.c.b16 %v500, %v498
        %v599 = vpack.c.b16 %v501, %v499
        %v600 = vpack.c.b16 %v504, %v502
        %v601 = vpack.c.b16 %v505, %v503
        %v602 = vpack.c.b16 %v508, %v506
        %v603 = vpack.c.b16 %v509, %v507
        %v604 = vpack.c.b16 %v512, %v510
        %v605 = vpack.c.b16 %v513, %v511
        %v606 = vpack.c.b16 %v516, %v514
        %v607 = vpack.c.b16 %v517, %v515
        %v608 = vpack.c.b16 %v520, %v518
        %v609 = vpack.c.b16 %v521, %v519
        %v610 = vpack.c.b16 %v524, %v522
        %v611 = vpack.c.b16 %v525, %v523
        %v612 = vpack.c.b16 %v528, %v526
        %v613 = vpack.c.b16 %v529, %v527
        %v614 = vpack.c.b16 %v532, %v530
        %v615 = vpack.c.b16 %v533, %v531
        %v616 = vpack.c.b16 %v536, %v534
        %v617 = vpack.c.b16 %v537, %v535
        %v618 = vpack.c.b16 %v540, %v538
        %v619 = vpack.c.b16 %v541, %v539
        %v620 = vpack.c.b16 %v544, %v542
        %v621 = vpack.c.b16 %v545, %v543
        %v622 = vpack.c.b16 %v548, %v546
        %v623 = vpack.c.b16 %v549, %v547
        %v624 = vpack.c.b16 %v552, %v550
        %v625 = vpack.c.b16 %v553, %v551
        %v626 = vpack.c.b16 %v556, %v554
        %v627 = vpack.c.b16 %v557, %v555
        %v628 = vpack.c.b16 %v560, %v558
        %v629 = vpack.c.b16 %v561, %v559
        %v630 = vpack.c.b16 %v564, %v562
        %v631 = vpack.c.b16 %v565, %v563
        %v632 = vpack.c.b16 %v568, %v566
        %v633 = vpack.c.b16 %v569, %v567
        %698 = vmatprep.subr.bf16.mxu0 %v571
        %699 = vmatpush1.bf16.msra.mxu0 %v570
        %700 = vmatprep.subr.bf16.mxu0 %v573
        %701 = vmatpush1.bf16.msra.mxu0 %v572
        %702 = vmatprep.subr.bf16.mxu0 %v575
        %703 = vmatpush1.bf16.msra.mxu0 %v574
        %704 = vmatprep.subr.bf16.mxu0 %v577
        %705 = vmatpush1.bf16.msra.mxu0 %v576
        %706 = vmatprep.subr.bf16.mxu0 %v579
        %707 = vmatpush1.bf16.msra.mxu0 %v578
        %708 = vmatprep.subr.bf16.mxu0 %v581
        %709 = vmatpush1.bf16.msra.mxu0 %v580
        %710 = vmatprep.subr.bf16.mxu0 %v583
        %711 = vmatpush1.bf16.msra.mxu0 %v582
        %712 = vmatprep.subr.bf16.mxu0 %v585
        %713 = vmatpush1.bf16.msra.mxu0 %v584
        %714 = vmatprep.subr.bf16.mxu0 %v587
        %715 = vmatpush1.bf16.msra.mxu0 %v586
        %716 = vmatprep.subr.bf16.mxu0 %v589
        %717 = vmatpush1.bf16.msra.mxu0 %v588
        %718 = vmatprep.subr.bf16.mxu0 %v591
        %719 = vmatpush1.bf16.msra.mxu0 %v590
        %720 = vmatprep.subr.bf16.mxu0 %v593
        %721 = vmatpush1.bf16.msra.mxu0 %v592
        %722 = vmatprep.subr.bf16.mxu0 %v595
        %723 = vmatpush1.bf16.msra.mxu0 %v594
        %724 = vmatprep.subr.bf16.mxu0 %v597
        %725 = vmatpush1.bf16.msra.mxu0 %v596
        %726 = vmatprep.subr.bf16.mxu0 %v599
        %727 = vmatpush1.bf16.msra.mxu0 %v598
        %728 = vmatprep.subr.bf16.mxu0 %v601
        %729 = vmatpush1.bf16.msra.mxu0 %v600
        %730 = vmatprep.mubr.bf16.mxu0 %v371
        %731 = vmatmul.mubr.bf16.gmra.mrb[0].mxu0 %v370
        %v732 = vpop.f32.mrb[0].mxu0
        %v733 = vadd.f32 0.0, %v732
        %v734 = vpop.f32.mrb[0].mxu0
        %v735 = vadd.f32 0.0, %v734
        %v736 = vpop.f32.mrb[0].mxu0
        %v737 = vadd.f32 0.0, %v736
        %v738 = vpop.f32.mrb[0].mxu0
        %v739 = vadd.f32 0.0, %v738
        %740 = vdwg.mxu0
        %741 = vmatprep.subr.bf16.mxu0 %v603
        %742 = vmatpush1.bf16.msra.mxu0 %v602
        %743 = vmatprep.subr.bf16.mxu0 %v605
        %744 = vmatpush1.bf16.msra.mxu0 %v604
        %745 = vmatprep.subr.bf16.mxu0 %v607
        %746 = vmatpush1.bf16.msra.mxu0 %v606
        %747 = vmatprep.subr.bf16.mxu0 %v609
        %748 = vmatpush1.bf16.msra.mxu0 %v608
        %749 = vmatprep.subr.bf16.mxu0 %v611
        %750 = vmatpush1.bf16.msra.mxu0 %v610
        %751 = vmatprep.subr.bf16.mxu0 %v613
        %752 = vmatpush1.bf16.msra.mxu0 %v612
        %753 = vmatprep.subr.bf16.mxu0 %v615
        %754 = vmatpush1.bf16.msra.mxu0 %v614
        %755 = vmatprep.subr.bf16.mxu0 %v617
        %756 = vmatpush1.bf16.msra.mxu0 %v616
        %757 = vmatprep.subr.bf16.mxu0 %v619
        %758 = vmatpush1.bf16.msra.mxu0 %v618
        %759 = vmatprep.subr.bf16.mxu0 %v621
        %760 = vmatpush1.bf16.msra.mxu0 %v620
        %761 = vmatprep.subr.bf16.mxu0 %v623
        %762 = vmatpush1.bf16.msra.mxu0 %v622
        %763 = vmatprep.subr.bf16.mxu0 %v625
        %764 = vmatpush1.bf16.msra.mxu0 %v624
        %765 = vmatprep.subr.bf16.mxu0 %v627
        %766 = vmatpush1.bf16.msra.mxu0 %v626
        %767 = vmatprep.subr.bf16.mxu0 %v629
        %768 = vmatpush1.bf16.msra.mxu0 %v628
        %769 = vmatprep.subr.bf16.mxu0 %v631
        %770 = vmatpush1.bf16.msra.mxu0 %v630
        %771 = vmatprep.subr.bf16.mxu0 %v633
        %772 = vmatpush1.bf16.msra.mxu0 %v632
        %773 = vmatprep.mubr.bf16.mxu0 %v373
        %774 = vmatmul.mubr.bf16.gmra.mrb[0].mxu0 %v372
        %v775 = vpop.f32.mrb[0].mxu0
        %v776 = vadd.f32 %v733, %v775
        %v777 = vpop.f32.mrb[0].mxu0
        %v778 = vadd.f32 %v735, %v777
        %v779 = vpop.f32.mrb[0].mxu0
        %v780 = vadd.f32 %v737, %v779
        %v781 = vpop.f32.mrb[0].mxu0
        %v782 = vadd.f32 %v739, %v781
        %783 = vdwg.mxu0
        %v784 = vadd.f32 %v286, %v776
        %v785 = vadd.f32 %v287, %v778
        %v786 = vadd.f32 %v288, %v780
        %v787 = vadd.f32 %v289, %v782
        %788 = vst [vmem:[#allocation2] sm:$0xff] %v784
        %789 = vst [vmem:[#allocation2 + $0x8] sm:$0xff] %v785
        %790 = vst [vmem:[#allocation2 + $0x10] sm:$0xff] %v786
        %791 = vst [vmem:[#allocation2 + $0x18] sm:$0xff] %v787
        %p792 = scmp.eq.s32.totalorder %s28, 1
        // Predicated region
        $region45: #{tpu_custom_call.1} parent=31 // pred_check
          %p793 = pneg %p792
        $region46: #{tpu_custom_call.1} parent=31 // pred_check_branch
          %795 = sbr.rel (%p793) target = $region48
        $region47: #{tpu_custom_call.1} parent=31 // pred_region
          %v796 = vld [vmem:[#allocation2] sm:$0xff]
          %v797 = vld [vmem:[#allocation2 + $0x8] sm:$0xff]
          %v798 = vld [vmem:[#allocation2 + $0x10] sm:$0xff]
          %v799 = vld [vmem:[#allocation2 + $0x18] sm:$0xff]
          %v800 = vld [vmem:[%s274] sm:$0x3]
          %v802 = vlaneseq
          %v803 = vshrl.u32 %v802, 7
          %v804 = vsub.s32 0, %v803
          %v805 = vrot.slane %v800, %v804
          %v806 = vlaneseq
          %v807 = vshrl.u32 %v806, 7
          %v808 = vsub.s32 1, %v807
          %v809 = vrot.slane %v800, %v808
          %v812 = vadd.f32 %v796, %v805
          %v813 = vadd.f32 %v797, %v809
          %v814 = vadd.f32 %v798, %v805
          %v815 = vadd.f32 %v799, %v809
          %816 = vst [vmem:[#allocation8] sm:$0xff] %v812
          %817 = vst [vmem:[#allocation8 + $0x8] sm:$0xff] %v813
          %818 = vst [vmem:[#allocation8 + $0x10] sm:$0xff] %v814
          %819 = vst [vmem:[#allocation8 + $0x18] sm:$0xff] %v815
        $region48: #{tpu_custom_call.1} parent=31 // pred_fallthru
          _
        // Predicated region
        $region49: #{tpu_custom_call.1} parent=31 // pred_check
          %p820 = pneg %p142
        $region50: #{tpu_custom_call.1} parent=31 // pred_check_branch
          %822 = sbr.rel (%p820) target = $region52
        $region51: #{tpu_custom_call.1} parent=31 // pred_region
          %s823 = smul.u32 2, %s26
          %s824 = smul.u32 2, %s27
          %s826 = ssub.s32 512, 512
          %827 = vsyncadd [#allocation5], %s826
          %s828 = smul.addr %s823, 2
          %s829 = sadd.s32 %s824, %s828
          %s830 = smul.addr %s829, 128
          %s831 = scalar_lea.hbm %s3, %s830
          %s832 = sshll.u32 [#allocation8], 4
          %s833 = int_to_ptr.vmem [resolvable:$true] %s832
          %838 = dma.vmem_to_hbm [thread:$0]  %s833, 512, %s831, [#allocation5], 256, 256, 16
        $region52: #{tpu_custom_call.1} parent=31 // pred_fallthru
          _
        // Predicated region
        $region53: #{tpu_custom_call.1} parent=31 // pred_check
          %p839 = pneg %p142
        $region54: #{tpu_custom_call.1} parent=31 // pred_check_branch
          %841 = sbr.rel (%p839) target = $region56
        $region55: #{tpu_custom_call.1} parent=31 // pred_region
          %842 = dma.done [#allocation5], 512
        $region56: #{tpu_custom_call.1} parent=31 // pred_fallthru
          _
      $region32: #{tpu_custom_call.1} parent=5 // pred_fallthru
        _
      %p843 = scmp.le.s32.totalorder 2, %s16
      // Predicated region
      $region57: #{tpu_custom_call.1} parent=5 // pred_check
        %p844 = pneg %p843
      $region58: #{tpu_custom_call.1} parent=5 // pred_check_branch
        %846 = sbr.rel (%p844) target = $region60
      $region59: #{tpu_custom_call.1} parent=5 // pred_region
        %s847 = ssub.s32 %s16, 2
      $region60: #{tpu_custom_call.1} parent=5 // pred_fallthru
        _
    $region6: #{tpu_custom_call.1} parent=1 // loop_footer
      %s20 = sadd.s32 1, %s16
    $region7: #{tpu_custom_call.1} parent=1 // loop_footer_branch
      %15 = sbr.rel target = $region3
    $region8: #{tpu_custom_call.1} parent=1 // loop_exit
      _
    %848 = vsyncpa [#allocation4], 1
    %s849 = scalar_lea.sflag [#allocation4], 1
    %850 = vsyncpa %s849, 1
    %851 = vsyncpa [#allocation7], 1
    %s852 = scalar_lea.sflag [#allocation7], 1
    %853 = vsyncpa %s852, 1
    %854 = vsyncpa [#allocation5], 1
    %s855 = scalar_lea.sflag [#allocation5], 1
    %856 = vsyncpa %s855, 1

</llo_original>
